<compile_context>
chip_gen: v7x
topology: tpu7x:2x2x1
jax: 0.10.0
libtpu: 0.0.40
codegen_flags: <defaults>
</compile_context>

<pallas_src>
import math

import numpy as np

import jax
import jax.numpy as jnp
from jax.experimental import pallas as pl
from jax.experimental.pallas import tpu as pltpu


_VMEM_BUDGET_BYTES = 36 * 1024 * 1024   # target working set for the pipeline
_VMEM_LIMIT_BYTES = 48 * 1024 * 1024    # scoped VMEM limit handed to Mosaic


# ---------------------------------------------------------------------------
# Kernel: whole additive-attention forward for one batch tile.
# ---------------------------------------------------------------------------
def _additive_attention_kernel(state_ref, ctx_ref, cov_ref, mask_ref,
                               ws_ref, bs_ref, wh_ref, wx_ref, v_ref,
                               wc_ref, attn_ref, score_ref):
    Bt, T, D2 = ctx_ref.shape

    ctx = ctx_ref[...]                                   # (Bt, T, D2) native dtype

    # Decoder-state feature: (Bt, 2D) = state @ W_s^T + b_s   (MXU)
    state_feat = (jnp.dot(state_ref[...], ws_ref[...],
                          preferred_element_type=jnp.float32)
                  + bs_ref[...])                                     # (Bt, 2D)

    # Encoder feature: one big MXU matmul over all Bt*T rows.  T is padded to
    # a multiple of 8 in the wrapper, so this reshape is a layout-free
    # sublane re-tiling (no relayout copy).  Context stays in its input dtype
    # (bf16 runs the MXU at native rate); accumulation is f32.
    enc_feat = jnp.dot(ctx.reshape(Bt * T, D2), wh_ref[...],
                       preferred_element_type=jnp.float32
                       ).reshape(Bt, T, D2)                          # (Bt, T, 2D)

    # Coverage feature: scalar-per-position times the W_x column (rank-1),
    # as a broadcast multiply on the VPU.  Coverage arrives lane-dense (Bt, T)
    # and is expanded to a (Bt, T, 1) sublane view only here.
    cov_feat = cov_ref[...][:, :, None] * wx_ref[...].reshape(1, 1, D2)

    # e = tanh(encoder + state + coverage)   (EUP)
    e = jnp.tanh(enc_feat + state_feat[:, None, :] + cov_feat)       # (Bt, T, 2D)

    # score = e . v   -> lane reduction; result is lane-dense (Bt, T).
    score = jnp.sum(e * v_ref[...].reshape(1, 1, D2), axis=-1)       # (Bt, T)

    # Masked, renormalised softmax over T (the lane axis).
    # softmax(score)*mask / sum(softmax(score)*mask) == exp(score-m)*mask
    # / sum(exp(score-m)*mask): the softmax denominator cancels exactly.
    m = jnp.max(score, axis=-1, keepdims=True)                       # (Bt, 1)
    ex = jnp.exp(score - m)                                          # (Bt, T)
    masked = ex * mask_ref[...]                                      # (Bt, T)
    denom = jnp.sum(masked, axis=-1, keepdims=True)                  # (Bt, 1)
    normed = masked * pl.reciprocal(denom, approx=True)              # (Bt, T)

    # Weighted context: sum_t attn[b, t] * context[b, t, :]  -> (Bt, 2D).
    # Upcast context to f32 only here (v5e has no bf16 VPU).
    wc = jnp.sum(normed[:, :, None] * ctx.astype(jnp.float32), axis=1)

    wc_ref[...] = wc
    attn_ref[...] = normed
    score_ref[...] = score


# ---------------------------------------------------------------------------
# VMEM-budget-derived batch tile.
# ---------------------------------------------------------------------------
def _choose_block_b(B, T, D2, ctx_bytes, budget_bytes=_VMEM_BUDGET_BYTES):
    # Grid-invariant weight blocks (W_s^T, W_h^T + three (1, D2) rows).  They
    # are double-buffered by the pipeline even though their block index never
    # changes, so charge two copies instead of relying on pl.Buffered(1).
    fixed = 2 * (2 * D2 * D2 * 4 + 3 * D2 * 4)
    avail = budget_bytes - fixed
    # Per batch row, double-buffered: context tile (dominant), state in,
    # weighted-context out, coverage + mask in, attn + score out.
    per_row = 2 * (T * D2 * ctx_bytes + 2 * D2 * 4 + 4 * T * 4)
    bb = int(avail // per_row) if avail > 0 else 0
    if bb >= B:
        return B
    return max((bb // 8) * 8, 8)


# ---------------------------------------------------------------------------
# Wrapper: layout glue is plain JAX; all attention math runs in the kernel.
# ---------------------------------------------------------------------------
def additive_attention_forward(params, state, context, coverage, padding_mask,
                               *, block_b=None, min_grid_tiles=1):
    hidden_state, cell_state = state
    B, T, D2 = context.shape
    D = D2 // 2

    # state = cat(h.view(-1, D), c.view(-1, D), dim=1)   -> (B, 2D)
    state_cat = jnp.concatenate(
        [hidden_state.reshape(-1, D), cell_state.reshape(-1, D)],
        axis=1).astype(jnp.float32)

    # Context keeps its input dtype (bf16 stays bf16): it is the dominant HBM
    # traffic of this bandwidth-bound kernel, so no f32 upcast here.
    ctx = context
    cov2 = coverage.reshape(B, T).astype(jnp.float32)                 # (B, T)
    mask2 = padding_mask.reshape(B, T).astype(jnp.float32)            # (B, T)

    # Pad T to a multiple of 8 so the in-kernel reshape around the W_h matmul
    # is layout-free.  Padded positions get mask=0, so they never contribute.
    T_pad = ((T + 7) // 8) * 8
    if T_pad != T:
        pad = T_pad - T
        ctx = jnp.pad(ctx, ((0, 0), (0, pad), (0, 0)))
        cov2 = jnp.pad(cov2, ((0, 0), (0, pad)))
        mask2 = jnp.pad(mask2, ((0, 0), (0, pad)))

    # nn.Linear weights are (out, in); pre-transpose so the kernel does x @ W.
    ws_t = jnp.transpose(params["W_s"]).astype(jnp.float32)           # (2D, 2D)
    b_s = params["b_s"].reshape(1, D2).astype(jnp.float32)            # (1, 2D)
    wh_t = jnp.transpose(params["W_h"]).astype(ctx.dtype)             # MXU dtype match
    wx_r = params["W_x"].reshape(1, D2).astype(jnp.float32)           # (1, 2D)
    v_r = params["v"].reshape(1, D2).astype(jnp.float32)              # (1, 2D)

    if block_b is None:
        block_b = _choose_block_b(B, T_pad, D2, jnp.dtype(ctx.dtype).itemsize)
        # v7x has two TensorCores: pass min_grid_tiles=2 so the "parallel"
        # batch axis actually splits across both.  v5e/v6e prefer one tile.
        if min_grid_tiles > 1 and B >= 8 * min_grid_tiles:
            cap = max(((-(-B // min_grid_tiles)) // 8) * 8, 8)
            block_b = min(block_b, cap)
    nb = pl.cdiv(B, block_b)

    bmap2 = lambda i: (i, 0)
    bmap3 = lambda i: (i, 0, 0)
    cmap2 = lambda i: (0, 0)

    grid_spec = pltpu.PrefetchScalarGridSpec(
        num_scalar_prefetch=0,
        grid=(nb,),
        in_specs=[
            pl.BlockSpec((block_b, D2), bmap2),          # state
            pl.BlockSpec((block_b, T_pad, D2), bmap3),   # context (native dtype)
            pl.BlockSpec((block_b, T_pad), bmap2),       # coverage (lane-dense)
            pl.BlockSpec((block_b, T_pad), bmap2),       # padding mask (lane-dense)
            pl.BlockSpec((D2, D2), cmap2),               # W_s^T
            pl.BlockSpec((1, D2), cmap2),                # b_s
            pl.BlockSpec((D2, D2), cmap2),               # W_h^T
            pl.BlockSpec((1, D2), cmap2),                # W_x row
            pl.BlockSpec((1, D2), cmap2),                # v row
        ],
        out_specs=(
            pl.BlockSpec((block_b, D2), bmap2),          # weighted context
            pl.BlockSpec((block_b, T_pad), bmap2),       # normed masked attention
            pl.BlockSpec((block_b, T_pad), bmap2),       # raw score
        ),
    )

    wc, attn2, score2 = pl.pallas_call(
        _additive_attention_kernel,
        out_shape=(
            jax.ShapeDtypeStruct((B, D2), jnp.float32),
            jax.ShapeDtypeStruct((B, T_pad), jnp.float32),
            jax.ShapeDtypeStruct((B, T_pad), jnp.float32),
        ),
        grid_spec=grid_spec,
        compiler_params=pltpu.CompilerParams(
            dimension_semantics=("parallel",),
            vmem_limit_bytes=_VMEM_LIMIT_BYTES),
    )(state_cat, ctx, cov2, mask2, ws_t, b_s, wh_t, wx_r, v_r)

    weighted_context = wc.reshape(B, 1, D2)
    normed_masked_attention = attn2[:, :T]
    score = score2[:, :T]
    # coverage is returned unchanged, exactly like the PyTorch module.
    return weighted_context, normed_masked_attention, coverage, score


# ---------------------------------------------------------------------------
# Pure-JAX reference (mirrors the PyTorch forward op-for-op) for validation.
# ---------------------------------------------------------------------------
def _ref_forward(params, state, context, coverage, padding_mask):
    hidden_state, cell_state = state
    B, T, D2 = context.shape
    D = D2 // 2
    hp = jax.lax.Precision.HIGHEST

    st = jnp.concatenate(
        [hidden_state.reshape(-1, D), cell_state.reshape(-1, D)], axis=1)
    state_feat = jnp.dot(st, params["W_s"].T, precision=hp) + params["b_s"]
    enc_feat = jnp.dot(context.reshape(-1, D2), params["W_h"].T, precision=hp)
    cov_feat = jnp.dot(coverage.reshape(-1, 1), params["W_x"].T, precision=hp)
    feat = enc_feat + jnp.repeat(state_feat, T, axis=0) + cov_feat
    e = jnp.tanh(feat)
    score = jnp.dot(e, params["v"].T, precision=hp).reshape(B, T)
    attn = jax.nn.softmax(score, axis=1)
    masked = attn * padding_mask
    normed = masked / jnp.sum(masked, axis=1, keepdims=True)
    wc = jnp.einsum("bt,btd->bd", normed, context,
                    precision=hp).reshape(B, 1, D2)
    return wc, normed, coverage, score


# ---------------------------------------------------------------------------
# Deterministic parameter init (matches nn.Linear default init shapes).
# ---------------------------------------------------------------------------
def init_params(key, vector_dim):
    D2 = 2 * vector_dim
    ks = jax.random.split(key, 5)

    def linear_w(k, out_dim, in_dim):
        bound = 1.0 / math.sqrt(in_dim)
        return jax.random.uniform(k, (out_dim, in_dim), jnp.float32,
                                  -bound, bound)

    return {
        "W_h": linear_w(ks[0], D2, D2),                 # Linear(2D, 2D, bias=False)
        "W_s": linear_w(ks[1], D2, D2),                 # Linear(2D, 2D)
        "b_s": jax.random.uniform(ks[2], (D2,), jnp.float32,
                                  -1.0 / math.sqrt(D2), 1.0 / math.sqrt(D2)),
        "W_x": linear_w(ks[3], D2, 1),                  # Linear(1, 2D, bias=False)
        "v":   linear_w(ks[4], 1, D2),                  # Linear(2D, 1, bias=False)
    }


if __name__ == "__main__":
    vector_dim = 32            # -> double_vector_dim = 64
    B, T = 2, 8                # batch, input_length

    key = jax.random.PRNGKey(0)
    kp, kh, kc, kx, kcov = jax.random.split(key, 5)
    params = init_params(kp, vector_dim)

    hidden_state = 0.1 * jax.random.normal(kh, (1, B, vector_dim), jnp.float32)
    cell_state = 0.1 * jax.random.normal(kc, (1, B, vector_dim), jnp.float32)
    context = jax.random.normal(kx, (B, T, 2 * vector_dim), jnp.float32)
    coverage = jax.random.uniform(kcov, (B, T), jnp.float32)
    padding_mask = jnp.array([[1.0] * T,
                              [1.0] * 5 + [0.0] * (T - 5)], jnp.float32)

    wc, attn, cov_out, score = additive_attention_forward(
        params, (hidden_state, cell_state), context, coverage, padding_mask)
    wc = jax.block_until_ready(wc)
    attn = jax.block_until_ready(attn)
    score = jax.block_until_ready(score)

    # Validate against the pure-JAX reference of the PyTorch forward.
    ref_wc, ref_attn, ref_cov, ref_score = _ref_forward(
        params, (hidden_state, cell_state), context, coverage, padding_mask)

    np.testing.assert_allclose(np.asarray(score), np.asarray(ref_score),
                               rtol=5e-3, atol=1e-4)
    # attn / wc go through the EUP approximate reciprocal -> slightly looser.
    np.testing.assert_allclose(np.asarray(attn), np.asarray(ref_attn),
                               rtol=2e-2, atol=1e-5)
    np.testing.assert_allclose(np.asarray(wc), np.asarray(ref_wc),
                               rtol=2e-2, atol=1e-4)
    np.testing.assert_allclose(np.asarray(cov_out), np.asarray(coverage),
                               rtol=0, atol=0)

    assert wc.shape == (B, 1, 2 * vector_dim)
    assert attn.shape == (B, T)
    assert score.shape == (B, T)
    assert cov_out.shape == coverage.shape
    print("KERNEL_OK")
</pallas_src>

<mosaic_0001>
module attributes {stable_mosaic.version = 11 : i64} {
  func.func @_additive_attention_kernel(%arg0: i32, %arg1: memref<2x64xf32, #tpu.memory_space<vmem>>, %arg2: memref<2x8x64xf32, #tpu.memory_space<vmem>>, %arg3: memref<2x8xf32, #tpu.memory_space<vmem>>, %arg4: memref<2x8xf32, #tpu.memory_space<vmem>>, %arg5: memref<64x64xf32, #tpu.memory_space<vmem>>, %arg6: memref<1x64xf32, #tpu.memory_space<vmem>>, %arg7: memref<64x64xf32, #tpu.memory_space<vmem>>, %arg8: memref<1x64xf32, #tpu.memory_space<vmem>>, %arg9: memref<1x64xf32, #tpu.memory_space<vmem>>, %arg10: memref<2x64xf32, #tpu.memory_space<vmem>>, %arg11: memref<2x8xf32, #tpu.memory_space<vmem>>, %arg12: memref<2x8xf32, #tpu.memory_space<vmem>>) attributes {dimension_semantics = [#tpu.dimension_semantics<parallel>], iteration_bounds = array<i64: 1>, scalar_prefetch = 0 : i64, scratch_operands = 0 : i64, tpu.core_type = #tpu.core_type<tc>, window_params = [{transform_indices = @transform_0, window_bounds = array<i64: 2, 64>}, {transform_indices = @transform_1, window_bounds = array<i64: 2, 8, 64>}, {transform_indices = @transform_2, window_bounds = array<i64: 2, 8>}, {transform_indices = @transform_3, window_bounds = array<i64: 2, 8>}, {pipeline_mode = #tpu.pipeline_mode<synchronous>, transform_indices = @transform_4, window_bounds = array<i64: 64, 64>}, {pipeline_mode = #tpu.pipeline_mode<synchronous>, transform_indices = @transform_5, window_bounds = array<i64: 1, 64>}, {pipeline_mode = #tpu.pipeline_mode<synchronous>, transform_indices = @transform_6, window_bounds = array<i64: 64, 64>}, {pipeline_mode = #tpu.pipeline_mode<synchronous>, transform_indices = @transform_7, window_bounds = array<i64: 1, 64>}, {pipeline_mode = #tpu.pipeline_mode<synchronous>, transform_indices = @transform_8, window_bounds = array<i64: 1, 64>}, {transform_indices = @transform_9, window_bounds = array<i64: 2, 64>}, {transform_indices = @transform_10, window_bounds = array<i64: 2, 8>}, {transform_indices = @transform_11, window_bounds = array<i64: 2, 8>}]} {
    %c0 = arith.constant 0 : index
    %c0_0 = arith.constant 0 : index
    %c0_1 = arith.constant 0 : index
    %0 = vector.load %arg2[%c0, %c0_0, %c0_1] : memref<2x8x64xf32, #tpu.memory_space<vmem>>, vector<2x8x64xf32>
    %c0_2 = arith.constant 0 : index
    %c0_3 = arith.constant 0 : index
    %1 = vector.load %arg1[%c0_2, %c0_3] : memref<2x64xf32, #tpu.memory_space<vmem>>, vector<2x64xf32>
    %c0_4 = arith.constant 0 : index
    %c0_5 = arith.constant 0 : index
    %2 = vector.load %arg5[%c0_4, %c0_5] : memref<64x64xf32, #tpu.memory_space<vmem>>, vector<64x64xf32>
    %cst = arith.constant dense<0.000000e+00> : vector<2x64xf32>
    %3 = tpu.matmul %1, %2, %cst {dimension_numbers = #tpu.dot_dimension_numbers<[1], [0], [0], [1], [0, 0, 1, 1], [], []>} : vector<2x64xf32>, vector<64x64xf32>, vector<2x64xf32> -> vector<2x64xf32>
    %c0_6 = arith.constant 0 : index
    %c0_7 = arith.constant 0 : index
    %4 = vector.load %arg6[%c0_6, %c0_7] : memref<1x64xf32, #tpu.memory_space<vmem>>, vector<1x64xf32>
    %5 = vector.broadcast %4 : vector<1x64xf32> to vector<2x64xf32>
    %6 = arith.addf %3, %5 : vector<2x64xf32>
    %7 = vector.shape_cast %0 : vector<2x8x64xf32> to vector<16x64xf32>
    %c0_8 = arith.constant 0 : index
    %c0_9 = arith.constant 0 : index
    %8 = vector.load %arg7[%c0_8, %c0_9] : memref<64x64xf32, #tpu.memory_space<vmem>>, vector<64x64xf32>
    %cst_10 = arith.constant dense<0.000000e+00> : vector<16x64xf32>
    %9 = tpu.matmul %7, %8, %cst_10 {dimension_numbers = #tpu.dot_dimension_numbers<[1], [0], [0], [1], [0, 0, 1, 1], [], []>} : vector<16x64xf32>, vector<64x64xf32>, vector<16x64xf32> -> vector<16x64xf32>
    %10 = vector.shape_cast %9 : vector<16x64xf32> to vector<2x8x64xf32>
    %c0_11 = arith.constant 0 : index
    %c0_12 = arith.constant 0 : index
    %11 = vector.load %arg3[%c0_11, %c0_12] : memref<2x8xf32, #tpu.memory_space<vmem>>, vector<2x8xf32>
    %12 = vector.shape_cast %11 : vector<2x8xf32> to vector<2x8x1xf32>
    %c0_13 = arith.constant 0 : index
    %c0_14 = arith.constant 0 : index
    %13 = vector.load %arg8[%c0_13, %c0_14] : memref<1x64xf32, #tpu.memory_space<vmem>>, vector<1x64xf32>
    %14 = vector.shape_cast %13 : vector<1x64xf32> to vector<1x1x64xf32>
    %15 = vector.broadcast %12 : vector<2x8x1xf32> to vector<2x8x64xf32>
    %16 = vector.broadcast %14 : vector<1x1x64xf32> to vector<2x8x64xf32>
    %17 = arith.mulf %15, %16 : vector<2x8x64xf32>
    %18 = vector.shape_cast %6 : vector<2x64xf32> to vector<2x1x64xf32>
    %19 = vector.broadcast %18 : vector<2x1x64xf32> to vector<2x8x64xf32>
    %20 = arith.addf %10, %19 : vector<2x8x64xf32>
    %21 = arith.addf %20, %17 : vector<2x8x64xf32>
    %22 = math.tanh %21 : vector<2x8x64xf32>
    %c0_15 = arith.constant 0 : index
    %c0_16 = arith.constant 0 : index
    %23 = vector.load %arg9[%c0_15, %c0_16] : memref<1x64xf32, #tpu.memory_space<vmem>>, vector<1x64xf32>
    %24 = vector.shape_cast %23 : vector<1x64xf32> to vector<1x1x64xf32>
    %25 = vector.broadcast %24 : vector<1x1x64xf32> to vector<2x8x64xf32>
    %26 = arith.mulf %22, %25 : vector<2x8x64xf32>
    %cst_17 = arith.constant dense<0.000000e+00> : vector<2x8xf32>
    %27 = vector.multi_reduction <add>, %26, %cst_17 [2] : vector<2x8x64xf32> to vector<2x8xf32>
    %cst_18 = arith.constant dense<0xFF800000> : vector<2xf32>
    %28 = vector.multi_reduction <maximumf>, %27, %cst_18 [1] : vector<2x8xf32> to vector<2xf32>
    %29 = vector.shape_cast %28 : vector<2xf32> to vector<2x1xf32>
    %30 = vector.broadcast %29 : vector<2x1xf32> to vector<2x8xf32>
    %31 = arith.subf %27, %30 : vector<2x8xf32>
    %32 = math.exp %31 : vector<2x8xf32>
    %c0_19 = arith.constant 0 : index
    %c0_20 = arith.constant 0 : index
    %33 = vector.load %arg4[%c0_19, %c0_20] : memref<2x8xf32, #tpu.memory_space<vmem>>, vector<2x8xf32>
    %34 = arith.mulf %32, %33 : vector<2x8xf32>
    %cst_21 = arith.constant dense<0.000000e+00> : vector<2xf32>
    %35 = vector.multi_reduction <add>, %34, %cst_21 [1] : vector<2x8xf32> to vector<2xf32>
    %36 = vector.shape_cast %35 : vector<2xf32> to vector<2x1xf32>
    %37 = tpu.reciprocal %36 {approx = true} : vector<2x1xf32> -> vector<2x1xf32>
    %38 = vector.broadcast %37 : vector<2x1xf32> to vector<2x8xf32>
    %39 = arith.mulf %34, %38 : vector<2x8xf32>
    %40 = vector.shape_cast %39 : vector<2x8xf32> to vector<2x8x1xf32>
    %41 = vector.broadcast %40 : vector<2x8x1xf32> to vector<2x8x64xf32>
    %42 = arith.mulf %41, %0 : vector<2x8x64xf32>
    %cst_22 = arith.constant dense<0.000000e+00> : vector<2x64xf32>
    %43 = vector.multi_reduction <add>, %42, %cst_22 [1] : vector<2x8x64xf32> to vector<2x64xf32>
    %c0_23 = arith.constant 0 : index
    %c0_24 = arith.constant 0 : index
    %44 = vector.load %arg10[%c0_23, %c0_24] : memref<2x64xf32, #tpu.memory_space<vmem>>, vector<2x64xf32>
    tpu.vector_store %arg10[%c0_23, %c0_24], %43 {strides = array<i32>} : memref<2x64xf32, #tpu.memory_space<vmem>>, vector<2x64xf32>,
    %c0_25 = arith.constant 0 : index
    %c0_26 = arith.constant 0 : index
    %45 = vector.load %arg11[%c0_25, %c0_26] : memref<2x8xf32, #tpu.memory_space<vmem>>, vector<2x8xf32>
    tpu.vector_store %arg11[%c0_25, %c0_26], %39 {strides = array<i32>} : memref<2x8xf32, #tpu.memory_space<vmem>>, vector<2x8xf32>,
    %c0_27 = arith.constant 0 : index
    %c0_28 = arith.constant 0 : index
    %46 = vector.load %arg12[%c0_27, %c0_28] : memref<2x8xf32, #tpu.memory_space<vmem>>, vector<2x8xf32>
    tpu.vector_store %arg12[%c0_27, %c0_28], %27 {strides = array<i32>} : memref<2x8xf32, #tpu.memory_space<vmem>>, vector<2x8xf32>,
    return
  }
  func.func @transform_0(%arg0: i32) -> (i32, i32) {
    %c0_i32 = arith.constant 0 : i32
    %c0_i32_0 = arith.constant 0 : i32
    return %arg0, %c0_i32 : i32, i32
  }
  func.func @transform_1(%arg0: i32) -> (i32, i32, i32) {
    %c0_i32 = arith.constant 0 : i32
    %c0_i32_0 = arith.constant 0 : i32
    %c0_i32_1 = arith.constant 0 : i32
    return %arg0, %c0_i32, %c0_i32_0 : i32, i32, i32
  }
  func.func @transform_2(%arg0: i32) -> (i32, i32) {
    %c0_i32 = arith.constant 0 : i32
    %c0_i32_0 = arith.constant 0 : i32
    return %arg0, %c0_i32 : i32, i32
  }
  func.func @transform_3(%arg0: i32) -> (i32, i32) {
    %c0_i32 = arith.constant 0 : i32
    %c0_i32_0 = arith.constant 0 : i32
    return %arg0, %c0_i32 : i32, i32
  }
  func.func @transform_4(%arg0: i32) -> (i32, i32) {
    %c0_i32 = arith.constant 0 : i32
    %c0_i32_0 = arith.constant 0 : i32
    %c0_i32_1 = arith.constant 0 : i32
    return %c0_i32, %c0_i32_0 : i32, i32
  }
  func.func @transform_5(%arg0: i32) -> (i32, i32) {
    %c0_i32 = arith.constant 0 : i32
    %c0_i32_0 = arith.constant 0 : i32
    %c0_i32_1 = arith.constant 0 : i32
    return %c0_i32, %c0_i32_0 : i32, i32
  }
  func.func @transform_6(%arg0: i32) -> (i32, i32) {
    %c0_i32 = arith.constant 0 : i32
    %c0_i32_0 = arith.constant 0 : i32
    %c0_i32_1 = arith.constant 0 : i32
    return %c0_i32, %c0_i32_0 : i32, i32
  }
  func.func @transform_7(%arg0: i32) -> (i32, i32) {
    %c0_i32 = arith.constant 0 : i32
    %c0_i32_0 = arith.constant 0 : i32
    %c0_i32_1 = arith.constant 0 : i32
    return %c0_i32, %c0_i32_0 : i32, i32
  }
  func.func @transform_8(%arg0: i32) -> (i32, i32) {
    %c0_i32 = arith.constant 0 : i32
    %c0_i32_0 = arith.constant 0 : i32
    %c0_i32_1 = arith.constant 0 : i32
    return %c0_i32, %c0_i32_0 : i32, i32
  }
  func.func @transform_9(%arg0: i32) -> (i32, i32) {
    %c0_i32 = arith.constant 0 : i32
    %c0_i32_0 = arith.constant 0 : i32
    return %arg0, %c0_i32 : i32, i32
  }
  func.func @transform_10(%arg0: i32) -> (i32, i32) {
    %c0_i32 = arith.constant 0 : i32
    %c0_i32_0 = arith.constant 0 : i32
    return %arg0, %c0_i32 : i32, i32
  }
  func.func @transform_11(%arg0: i32) -> (i32, i32) {
    %c0_i32 = arith.constant 0 : i32
    %c0_i32_0 = arith.constant 0 : i32
    return %arg0, %c0_i32 : i32, i32
  }
}

</mosaic_0001>

<llo_original>
// kernel: tpu_custom_call.1
$region0: #{tpu_custom_call.1}
  #allocation0 [shape = 'u32[]', space=smem, size = 0x4, offset = 0x4, fixed_abs, tag = 'smem constant byte address 0x4 - core index']
  #allocation1 [shape = 'u32[144,128]{1,0:T(1,128)}', space=vmem, size = 0x12000, scoped, tag = 'internal scratch']
  %s0 = inlined_call_operand.hbm [shape: f32[2,64], index: 0, kind: input, shape index: {}]
  %s1 = inlined_call_operand.hbm [shape: f32[2,8,64], index: 1, kind: input, shape index: {}]
  %s2 = inlined_call_operand.vmem [shape: f32[2,8], index: 2, kind: input, shape index: {}]
  %s3 = inlined_call_operand.vmem [shape: f32[2,8], index: 3, kind: input, shape index: {}]
  %s4 = inlined_call_operand.hbm [shape: f32[64,64], index: 4, kind: input, shape index: {}]
  %s5 = inlined_call_operand.vmem [shape: f32[1,64], index: 5, kind: input, shape index: {}]
  %s6 = inlined_call_operand.hbm [shape: f32[64,64], index: 6, kind: input, shape index: {}]
  %s7 = inlined_call_operand.vmem [shape: f32[1,64], index: 7, kind: input, shape index: {}]
  %s8 = inlined_call_operand.vmem [shape: f32[1,64], index: 8, kind: input, shape index: {}]
  %s9 = inlined_call_operand.hbm [shape: f32[2,64], index: 9, kind: output, shape index: {0}]
  %s10 = inlined_call_operand.hbm [shape: f32[2,8], index: 10, kind: output, shape index: {1}]
  %s11 = inlined_call_operand.hbm [shape: f32[2,8], index: 11, kind: output, shape index: {2}]
  %12 = xla_tuple %s9, %s10, %s11
  %s13 = sld [smem:[#allocation0]]
  $region78: #{tpu_custom_call.1} parent=0
    _
  %s15 = ssub.s32 1, %s13
  %s16 = scalar_select 0, %s15, %s13
  $region1: #{tpu_custom_call.1} parent=0
    #allocation2 [shape = 'u8[1024]{0}', space=vmem, size = 0x400, scoped, tag = 'input window, operand 0, single buffered']
    #allocation3 [shape = 's32[1]{0}', space=sflag, size = 0x4, scoped, tag = 'scoped memory for tpu_custom_call.1']
    #allocation4 [shape = 's32[1]{0}', space=sflag, size = 0x4, scoped, tag = 'scoped memory for tpu_custom_call.1']
    #allocation5 [shape = 'u8[8192]{0}', space=vmem, size = 0x2000, scoped, tag = 'input window, operand 1, single buffered']
    #allocation6 [shape = 's32[1]{0}', space=sflag, size = 0x4, scoped, tag = 'scoped memory for tpu_custom_call.1']
    #allocation7 [shape = 'u8[32768]{0}', space=vmem, size = 0x8000, scoped, tag = 'input window, operand 4, single buffered']
    #allocation8 [shape = 'u8[32768]{0}', space=vmem, size = 0x8000, scoped, tag = 'input window, operand 6, single buffered']
    #allocation9 [shape = 's32[1]{0}', space=sflag, size = 0x4, scoped, tag = 'scoped memory for tpu_custom_call.1']
    #allocation10 [shape = 'u8[1024]{0}', space=vmem, size = 0x400, scoped, tag = 'output window, operand 0, single buffered']
    #allocation11 [shape = 'u8[1024]{0}', space=vmem, size = 0x400, scoped, tag = 'output window, operand 1, single buffered']
    #allocation12 [shape = 's32[1]{0}', space=sflag, size = 0x4, scoped, tag = 'scoped memory for tpu_custom_call.1']
    #allocation13 [shape = 'u8[1024]{0}', space=vmem, size = 0x400, scoped, tag = 'output window, operand 2, single buffered']
    %17 = vsyncpa [#allocation3], 0
    %18 = vsyncpa [#allocation6], 0
    %19 = vsyncpa [#allocation9], 0
    %20 = vsyncpa [#allocation4], 0
    %21 = vsyncpa [#allocation12], 0
    // Predicated region
    $region2: #{tpu_custom_call.1} parent=1 // pred_check
      _
    $region3: #{tpu_custom_call.1} parent=1 // pred_check_branch
      %23 = sbr.rel (0) target = $region5
    $region4: #{tpu_custom_call.1} parent=1 // pred_region
      %s25 = ssub.s32 32, 32
      %26 = vsyncadd [#allocation3], %s25
      %s28 = sshll.u32 [#allocation2], 4
      %s29 = int_to_ptr.vmem [resolvable:$true] %s28
      %31 = dma.hbm_to_vmem [thread:$0]  %s0, 32, %s29, [#allocation3]
    $region5: #{tpu_custom_call.1} parent=1 // pred_fallthru
      _
    // Predicated region
    $region6: #{tpu_custom_call.1} parent=1 // pred_check
      _
    $region7: #{tpu_custom_call.1} parent=1 // pred_check_branch
      %33 = sbr.rel (0) target = $region9
    $region8: #{tpu_custom_call.1} parent=1 // pred_region
      %s35 = ssub.s32 256, 256
      %36 = vsyncadd [#allocation6], %s35
      %s37 = sshll.u32 [#allocation5], 4
      %s38 = int_to_ptr.vmem [resolvable:$true] %s37
      %43 = dma.hbm_to_vmem [thread:$0]  %s1, 256, %s38, [#allocation6], 128, 128, 8
    $region9: #{tpu_custom_call.1} parent=1 // pred_fallthru
      _
    // Predicated region
    $region10: #{tpu_custom_call.1} parent=1 // pred_check
      _
    $region11: #{tpu_custom_call.1} parent=1 // pred_check_branch
      %45 = sbr.rel (0) target = $region13
    $region12: #{tpu_custom_call.1} parent=1 // pred_region
      _
    $region13: #{tpu_custom_call.1} parent=1 // pred_fallthru
      _
    // Predicated region
    $region14: #{tpu_custom_call.1} parent=1 // pred_check
      _
    $region15: #{tpu_custom_call.1} parent=1 // pred_check_branch
      %47 = sbr.rel (0) target = $region17
    $region16: #{tpu_custom_call.1} parent=1 // pred_region
      _
    $region17: #{tpu_custom_call.1} parent=1 // pred_fallthru
      _
    // Predicated region
    $region18: #{tpu_custom_call.1} parent=1 // pred_check
      _
    $region19: #{tpu_custom_call.1} parent=1 // pred_check_branch
      %49 = sbr.rel (0) target = $region21
    $region20: #{tpu_custom_call.1} parent=1 // pred_region
      %s51 = ssub.s32 1024, 1024
      %52 = vsyncadd [#allocation6], %s51
      %s53 = sshll.u32 [#allocation7], 4
      %s54 = int_to_ptr.vmem [resolvable:$true] %s53
      %59 = dma.hbm_to_vmem [thread:$0]  %s4, 1024, %s54, [#allocation6], 128, 128, 8
    $region21: #{tpu_custom_call.1} parent=1 // pred_fallthru
      _
    // Predicated region
    $region22: #{tpu_custom_call.1} parent=1 // pred_check
      _
    $region23: #{tpu_custom_call.1} parent=1 // pred_check_branch
      %61 = sbr.rel (0) target = $region25
    $region24: #{tpu_custom_call.1} parent=1 // pred_region
      _
    $region25: #{tpu_custom_call.1} parent=1 // pred_fallthru
      _
    // Predicated region
    $region26: #{tpu_custom_call.1} parent=1 // pred_check
      _
    $region27: #{tpu_custom_call.1} parent=1 // pred_check_branch
      %63 = sbr.rel (0) target = $region29
    $region28: #{tpu_custom_call.1} parent=1 // pred_region
      %s65 = ssub.s32 1024, 1024
      %66 = vsyncadd [#allocation9], %s65
      %s67 = sshll.u32 [#allocation8], 4
      %s68 = int_to_ptr.vmem [resolvable:$true] %s67
      %73 = dma.hbm_to_vmem [thread:$0]  %s6, 1024, %s68, [#allocation9], 128, 128, 8
    $region29: #{tpu_custom_call.1} parent=1 // pred_fallthru
      _
    // Predicated region
    $region30: #{tpu_custom_call.1} parent=1 // pred_check
      _
    $region31: #{tpu_custom_call.1} parent=1 // pred_check_branch
      %75 = sbr.rel (0) target = $region33
    $region32: #{tpu_custom_call.1} parent=1 // pred_region
      _
    $region33: #{tpu_custom_call.1} parent=1 // pred_fallthru
      _
    // Predicated region
    $region34: #{tpu_custom_call.1} parent=1 // pred_check
      _
    $region35: #{tpu_custom_call.1} parent=1 // pred_check_branch
      %77 = sbr.rel (0) target = $region37
    $region36: #{tpu_custom_call.1} parent=1 // pred_region
      _
    $region37: #{tpu_custom_call.1} parent=1 // pred_fallthru
      _
    // Predicated region
    $region38: #{tpu_custom_call.1} parent=1 // pred_check
      _
    $region39: #{tpu_custom_call.1} parent=1 // pred_check_branch
      %79 = sbr.rel (0) target = $region41
    $region40: #{tpu_custom_call.1} parent=1 // pred_region
      %80 = dma.done [#allocation3], 32
    $region41: #{tpu_custom_call.1} parent=1 // pred_fallthru
      _
    // Predicated region
    $region42: #{tpu_custom_call.1} parent=1 // pred_check
      _
    $region43: #{tpu_custom_call.1} parent=1 // pred_check_branch
      %82 = sbr.rel (0) target = $region45
    $region44: #{tpu_custom_call.1} parent=1 // pred_region
      %83 = dma.done [#allocation6], 256
    $region45: #{tpu_custom_call.1} parent=1 // pred_fallthru
      _
    // Predicated region
    $region46: #{tpu_custom_call.1} parent=1 // pred_check
      _
    $region47: #{tpu_custom_call.1} parent=1 // pred_check_branch
      %85 = sbr.rel (0) target = $region49
    $region48: #{tpu_custom_call.1} parent=1 // pred_region
      %86 = dma.done [#allocation6], 1024
    $region49: #{tpu_custom_call.1} parent=1 // pred_fallthru
      _
    // Predicated region
    $region50: #{tpu_custom_call.1} parent=1 // pred_check
      _
    $region51: #{tpu_custom_call.1} parent=1 // pred_check_branch
      %88 = sbr.rel (0) target = $region53
    $region52: #{tpu_custom_call.1} parent=1 // pred_region
      %89 = dma.done [#allocation9], 1024
    $region53: #{tpu_custom_call.1} parent=1 // pred_fallthru
      _
    %v90 = vld [vmem:[#allocation5] sm:$0xff]
    %v91 = vld [vmem:[#allocation5 + $0x8] sm:$0xff]
    %v92 = vld [vmem:[#allocation2] sm:$0x3]
    %v93 = vld [vmem:[#allocation7] sm:$0xff]
    %v94 = vld [vmem:[#allocation7 + $0x8] sm:$0xff]
    %v95 = vld [vmem:[#allocation7 + $0x10] sm:$0xff]
    %v96 = vld [vmem:[#allocation7 + $0x18] sm:$0xff]
    %v97 = vld [vmem:[#allocation7 + $0x20] sm:$0xff]
    %v98 = vld [vmem:[#allocation7 + $0x28] sm:$0xff]
    %v99 = vld [vmem:[#allocation7 + $0x30] sm:$0xff]
    %v100 = vld [vmem:[#allocation7 + $0x38] sm:$0xff]
    %v101 = vld [vmem:[%s5] sm:$0x1]
    %v103 = vlaneseq
    %v104 = vshrl.u32 %v103, 7
    %v105 = vsub.s32 0, %v104
    %v106 = vrot.slane %v101, %v105
    %vm108 = vcmask 523264
    %v110 = vsel %vm108, %v92, 0
    %112 = vmatprep.subr.mxu0 0.0
    %113 = vmatpush1.msra.mxu0 %v93
    %114 = vmatprep.subr.mxu0 0.0
    %115 = vmatpush1.msra.mxu0 %v94
    %116 = vmatprep.subr.mxu0 0.0
    %117 = vmatpush1.msra.mxu0 %v95
    %118 = vmatprep.subr.mxu0 0.0
    %119 = vmatpush1.msra.mxu0 %v96
    %120 = vmatprep.subr.mxu0 0.0
    %121 = vmatpush1.msra.mxu0 %v97
    %122 = vmatprep.subr.mxu0 0.0
    %123 = vmatpush1.msra.mxu0 %v98
    %124 = vmatprep.subr.mxu0 0.0
    %125 = vmatpush1.msra.mxu0 %v99
    %126 = vmatprep.subr.mxu0 0.0
    %127 = vmatpush1.msra.mxu0 %v100
    %128 = vmatprep.subr.mxu0 0.0
    %129 = vmatpush1.msra.mxu0 0.0
    %130 = vmatprep.subr.mxu0 0.0
    %131 = vmatpush1.msra.mxu0 0.0
    %132 = vmatprep.subr.mxu0 0.0
    %133 = vmatpush1.msra.mxu0 0.0
    %134 = vmatprep.subr.mxu0 0.0
    %135 = vmatpush1.msra.mxu0 0.0
    %136 = vmatprep.subr.mxu0 0.0
    %137 = vmatpush1.msra.mxu0 0.0
    %138 = vmatprep.subr.mxu0 0.0
    %139 = vmatpush1.msra.mxu0 0.0
    %140 = vmatprep.subr.mxu0 0.0
    %141 = vmatpush1.msra.mxu0 0.0
    %142 = vmatprep.subr.mxu0 0.0
    %143 = vmatpush1.msra.mxu0 0.0
    %144 = vmatprep.subr.mxu0 0.0
    %145 = vmatpush1.msra.mxu0 0.0
    %146 = vmatprep.subr.mxu0 0.0
    %147 = vmatpush1.msra.mxu0 0.0
    %148 = vmatprep.subr.mxu0 0.0
    %149 = vmatpush1.msra.mxu0 0.0
    %150 = vmatprep.subr.mxu0 0.0
    %151 = vmatpush1.msra.mxu0 0.0
    %152 = vmatprep.subr.mxu0 0.0
    %153 = vmatpush1.msra.mxu0 0.0
    %154 = vmatprep.subr.mxu0 0.0
    %155 = vmatpush1.msra.mxu0 0.0
    %156 = vmatprep.subr.mxu0 0.0
    %157 = vmatpush1.msra.mxu0 0.0
    %158 = vmatprep.subr.mxu0 0.0
    %159 = vmatpush1.msra.mxu0 0.0
    %160 = vmatprep.subr.mxu0 0.0
    %161 = vmatpush1.msra.mxu0 0.0
    %162 = vmatprep.subr.mxu0 0.0
    %163 = vmatpush1.msra.mxu0 0.0
    %164 = vmatprep.subr.mxu0 0.0
    %165 = vmatpush1.msra.mxu0 0.0
    %166 = vmatprep.subr.mxu0 0.0
    %167 = vmatpush1.msra.mxu0 0.0
    %168 = vmatprep.subr.mxu0 0.0
    %169 = vmatpush1.msra.mxu0 0.0
    %170 = vmatprep.subr.mxu0 0.0
    %171 = vmatpush1.msra.mxu0 0.0
    %172 = vmatprep.subr.mxu0 0.0
    %173 = vmatpush1.msra.mxu0 0.0
    %174 = vmatprep.subr.mxu0 0.0
    %175 = vmatpush1.msra.mxu0 0.0
    %176 = vmatprep.mubr.f32.mxu0 0.0
    %177 = vmatmul.mubr.f32.gmra.mrb[0].mxu0 %v110
    %v178 = vpop.f32.mrb[0].mxu0
    %v179 = vadd.f32 %v106, %v178
    %v180 = vpop.f32.mrb[0].mxu0
    %181 = vdwg.mxu0
    %v182 = vld [vmem:[#allocation8] sm:$0xff]
    %v183 = vld [vmem:[#allocation8 + $0x8] sm:$0xff]
    %v184 = vld [vmem:[#allocation8 + $0x10] sm:$0xff]
    %v185 = vld [vmem:[#allocation8 + $0x18] sm:$0xff]
    %v186 = vld [vmem:[#allocation8 + $0x20] sm:$0xff]
    %v187 = vld [vmem:[#allocation8 + $0x28] sm:$0xff]
    %v188 = vld [vmem:[#allocation8 + $0x30] sm:$0xff]
    %v189 = vld [vmem:[#allocation8 + $0x38] sm:$0xff]
    %v191 = vsel %vm108, %v90, 0
    %v194 = vsel %vm108, %v91, 0
    %196 = vmatprep.subr.mxu0 0.0
    %197 = vmatpush1.msra.mxu0 %v182
    %198 = vmatprep.subr.mxu0 0.0
    %199 = vmatpush1.msra.mxu0 %v183
    %200 = vmatprep.subr.mxu0 0.0
    %201 = vmatpush1.msra.mxu0 %v184
    %202 = vmatprep.subr.mxu0 0.0
    %203 = vmatpush1.msra.mxu0 %v185
    %204 = vmatprep.subr.mxu0 0.0
    %205 = vmatpush1.msra.mxu0 %v186
    %206 = vmatprep.subr.mxu0 0.0
    %207 = vmatpush1.msra.mxu0 %v187
    %208 = vmatprep.subr.mxu0 0.0
    %209 = vmatpush1.msra.mxu0 %v188
    %210 = vmatprep.subr.mxu0 0.0
    %211 = vmatpush1.msra.mxu0 %v189
    %212 = vmatprep.subr.mxu0 0.0
    %213 = vmatpush1.msra.mxu0 0.0
    %214 = vmatprep.subr.mxu0 0.0
    %215 = vmatpush1.msra.mxu0 0.0
    %216 = vmatprep.subr.mxu0 0.0
    %217 = vmatpush1.msra.mxu0 0.0
    %218 = vmatprep.subr.mxu0 0.0
    %219 = vmatpush1.msra.mxu0 0.0
    %220 = vmatprep.subr.mxu0 0.0
    %221 = vmatpush1.msra.mxu0 0.0
    %222 = vmatprep.subr.mxu0 0.0
    %223 = vmatpush1.msra.mxu0 0.0
    %224 = vmatprep.subr.mxu0 0.0
    %225 = vmatpush1.msra.mxu0 0.0
    %226 = vmatprep.subr.mxu0 0.0
    %227 = vmatpush1.msra.mxu0 0.0
    %228 = vmatprep.subr.mxu0 0.0
    %229 = vmatpush1.msra.mxu0 0.0
    %230 = vmatprep.subr.mxu0 0.0
    %231 = vmatpush1.msra.mxu0 0.0
    %232 = vmatprep.subr.mxu0 0.0
    %233 = vmatpush1.msra.mxu0 0.0
    %234 = vmatprep.subr.mxu0 0.0
    %235 = vmatpush1.msra.mxu0 0.0
    %236 = vmatprep.subr.mxu0 0.0
    %237 = vmatpush1.msra.mxu0 0.0
    %238 = vmatprep.subr.mxu0 0.0
    %239 = vmatpush1.msra.mxu0 0.0
    %240 = vmatprep.subr.mxu0 0.0
    %241 = vmatpush1.msra.mxu0 0.0
    %242 = vmatprep.subr.mxu0 0.0
    %243 = vmatpush1.msra.mxu0 0.0
    %244 = vmatprep.subr.mxu0 0.0
    %245 = vmatpush1.msra.mxu0 0.0
    %246 = vmatprep.subr.mxu0 0.0
    %247 = vmatpush1.msra.mxu0 0.0
    %248 = vmatprep.subr.mxu0 0.0
    %249 = vmatpush1.msra.mxu0 0.0
    %250 = vmatprep.subr.mxu0 0.0
    %251 = vmatpush1.msra.mxu0 0.0
    %252 = vmatprep.subr.mxu0 0.0
    %253 = vmatpush1.msra.mxu0 0.0
    %254 = vmatprep.subr.mxu0 0.0
    %255 = vmatpush1.msra.mxu0 0.0
    %256 = vmatprep.subr.mxu0 0.0
    %257 = vmatpush1.msra.mxu0 0.0
    %258 = vmatprep.subr.mxu0 0.0
    %259 = vmatpush1.msra.mxu0 0.0
    %260 = vmatprep.mubr.f32.mxu0 0.0
    %261 = vmatmul.mubr.f32.gmra.mrb[0].mxu0 %v191
    %v262 = vpop.f32.mrb[0].mxu0
    %v263 = vadd.f32 0.0, %v262
    %v264 = vpop.f32.mrb[0].mxu0
    %265 = vmatprep.mubr.f32.mxu0 0.0
    %266 = vmatmul.mubr.f32.gmra.mrb[0].mxu0 %v194
    %v267 = vpop.f32.mrb[0].mxu0
    %v268 = vadd.f32 0.0, %v267
    %v269 = vpop.f32.mrb[0].mxu0
    %270 = vdwg.mxu0
    %v271 = vld [vmem:[%s2] sm:$0x3]
    %v272 = vlaneseq
    %v273 = vshrl.u32 %v272, 7
    %v274 = vsub.s32 0, %v273
    %v275 = vrot.slane %v271, %v274
    %277 = vbcast.lane.b32.xlu0 %v275, 256
    %v278 = vpop.permute.xlu0 %277
    %v279 = vlaneseq
    %v280 = vshrl.u32 %v279, 7
    %v281 = vsub.s32 1, %v280
    %v282 = vrot.slane %v271, %v281
    %284 = vbcast.lane.b32.xlu0 %v282, 256
    %v285 = vpop.permute.xlu0 %284
    %v286 = vld [vmem:[%s7] sm:$0x1]
    %v288 = vlaneseq
    %v289 = vshrl.u32 %v288, 7
    %v290 = vsub.s32 0, %v289
    %v291 = vrot.slane %v286, %v290
    %v293 = vmul.f32 %v278, %v291
    %v294 = vmul.f32 %v285, %v291
    %v297 = vunpack.c.l.s4 1966171168
    %v298 = vunpack.c.0.s8 %v297
    %v299 = vlaneseq
    %v300 = vshrl.u32 %v299, 7
    %v301 = vsub.s32 %v298, %v300
    %v302 = vrot.slane %v179, %v301
    %v303 = vcombine.high %v302, %v302
    %v305 = vunpack.c.l.s4 1966171168
    %v306 = vunpack.c.0.s8 %v305
    %v307 = vlaneseq
    %v308 = vshrl.u32 %v307, 7
    %v309 = vsub.s32 %v306, %v308
    %v310 = vrot.slane %v302, %v309
    %v312 = vunpack.c.l.s4 1966171168
    %v313 = vunpack.c.0.s8 %v312
    %v314 = vlaneseq
    %v315 = vshrl.u32 %v314, 7
    %v316 = vsub.s32 %v313, %v315
    %v317 = vrot.slane %v303, %v316
    %v318 = vlaneseq
    %v319 = vshrl.u32 %v318, 7
    %v320 = vsub.s32 0, %v319
    %v321 = vrot.slane %v310, %v320
    %v322 = vlaneseq
    %v323 = vshrl.u32 %v322, 7
    %v324 = vsub.s32 0, %v323
    %v325 = vrot.slane %v317, %v324
    %v328 = vadd.f32 %v263, %v321
    %v329 = vadd.f32 %v268, %v325
    %v330 = vadd.f32 %v328, %v293
    %v331 = vadd.f32 %v329, %v294
    %v332 = vtanh.pop %v330
    %v333 = vtanh.pop %v331
    %v334 = vld [vmem:[%s8] sm:$0x1]
    %v336 = vlaneseq
    %v337 = vshrl.u32 %v336, 7
    %v338 = vsub.s32 0, %v337
    %v339 = vrot.slane %v334, %v338
    %v341 = vmul.f32 %v332, %v339
    %v342 = vmul.f32 %v333, %v339
    %v343 = vsel %vm108, %v341, 0.0
    %344 = vadd.xlane.f32.xlu0 %v343
    %v345 = vpop.xlane.xlu0 %344
    %v346 = vsel %vm108, %v342, 0.0
    %347 = vadd.xlane.f32.xlu0 %v346
    %v348 = vpop.xlane.xlu0 %347
    %v351 = vlaneseq
    %v352 = vand.u32 %v351, 127
    %v353 = vlaneseq
    %v354 = vshrl.u32 %v353, 7
    %v355 = vsub.s32 %v352, %v354
    %v356 = vrot.slane %v345, %v355
    %v357 = vlaneseq
    %v358 = vshrl.u32 %v357, 7
    %v359 = vsub.s32 %v352, %v358
    %v360 = vrot.slane %v348, %v359
    %vm361 = vcmask 1041409
    %v362 = vsel %vm361, %v360, %v356
    %vm364 = vcmask 58368
    %v365 = vsel %vm364, %v362, -inf
    %366 = vmax.xlane.f32.xlu0 %v365
    %v367 = vpop.xlane.xlu0 %366
    %v369 = vlaneseq
    %v370 = vshrl.u32 %v369, 7
    %v371 = vsub.s32 0, %v370
    %v372 = vrot.slane %v367, %v371
    %v373 = vlaneseq
    %v374 = vshrl.u32 %v373, 7
    %v375 = vsub.s32 1, %v374
    %v376 = vrot.slane %v367, %v375
    %v379 = vsub.f32 %v345, %v372
    %v380 = vsub.f32 %v348, %v376
    %v381 = vmul.f32 %v379, 1.442695
    %v382 = vpow.pop %v381
    %v383 = vmul.f32 %v380, 1.442695
    %v384 = vpow.pop %v383
    %v385 = vld [vmem:[%s3] sm:$0x3]
    %v387 = vlaneseq
    %v388 = vshrl.u32 %v387, 7
    %v389 = vsub.s32 0, %v388
    %v390 = vrot.slane %v385, %v389
    %392 = vbcast.lane.b32.xlu0 %v390, 256
    %v393 = vpop.permute.xlu0 %392
    %v394 = vlaneseq
    %v395 = vshrl.u32 %v394, 7
    %v396 = vsub.s32 1, %v395
    %v397 = vrot.slane %v385, %v396
    %399 = vbcast.lane.b32.xlu0 %v397, 256
    %v400 = vpop.permute.xlu0 %399
    %v403 = vmul.f32 %v382, %v393
    %v404 = vmul.f32 %v384, %v400
    %407 = vset.pattern.permute.xlu0 0
    %408 = vperm.xlu0 %407, %v403
    %v409 = vpop.permute.xlu0 %408
    %410 = vset.pattern.permute.xlu0 0
    %411 = vperm.xlu0 %410, %v404
    %v412 = vpop.permute.xlu0 %411
    %v413 = vlaneseq
    %v414 = vshrl.u32 %v413, 7
    %v415 = vsub.s32 %v352, %v414
    %v416 = vrot.slane %v409, %v415
    %v417 = vlaneseq
    %v418 = vshrl.u32 %v417, 7
    %v419 = vsub.s32 %v352, %v418
    %v420 = vrot.slane %v412, %v419
    %v421 = vsel %vm361, %v420, %v416
    %v423 = vsel %vm364, %v421, 0.0
    %424 = vadd.xlane.f32.xlu0 %v423
    %v425 = vpop.xlane.xlu0 %424
    %v426 = vrcp.pop %v425
    %v428 = vlaneseq
    %v429 = vshrl.u32 %v428, 7
    %v430 = vsub.s32 0, %v429
    %v431 = vrot.slane %v426, %v430
    %v432 = vlaneseq
    %v433 = vshrl.u32 %v432, 7
    %v434 = vsub.s32 1, %v433
    %v435 = vrot.slane %v426, %v434
    %v438 = vmul.f32 %v403, %v431
    %v439 = vmul.f32 %v404, %v435
    %441 = vset.pattern.permute.xlu0 0
    %442 = vperm.xlu0 %441, %v438
    %v443 = vpop.permute.xlu0 %442
    %446 = vset.pattern.permute.xlu0 0
    %447 = vperm.xlu0 %446, %v439
    %v448 = vpop.permute.xlu0 %447
    %v450 = vmul.f32 %v443, %v90
    %v451 = vmul.f32 %v448, %v91
    %v452 = vsel %vm108, %v450, 0.0
    %v453 = vrot.slane %v452, 4
    %v454 = vadd.f32 %v452, %v453
    %v455 = vrot.slane %v454, 2
    %v456 = vadd.f32 %v454, %v455
    %v457 = vrot.slane %v456, 1
    %v458 = vadd.f32 %v456, %v457
    %v459 = vsel %vm108, %v451, 0.0
    %v460 = vrot.slane %v459, 4
    %v461 = vadd.f32 %v459, %v460
    %v462 = vrot.slane %v461, 2
    %v463 = vadd.f32 %v461, %v462
    %v464 = vrot.slane %v463, 1
    %v465 = vadd.f32 %v463, %v464
    %v468 = vsel %vm361, %v465, %v458
    %vm470 = vcmask 517120
    %471 = vst.msk [vmem:[#allocation10] sm:$0x3] %vm470, %v468
    %v472 = vlaneseq
    %v473 = vshrl.u32 %v472, 7
    %v474 = vsub.s32 %v352, %v473
    %v475 = vrot.slane %v443, %v474
    %v476 = vlaneseq
    %v477 = vshrl.u32 %v476, 7
    %v478 = vsub.s32 %v352, %v477
    %v479 = vrot.slane %v448, %v478
    %v480 = vsel %vm361, %v479, %v475
    %482 = vst.msk [vmem:[#allocation11] sm:$0x3] %vm364, %v480
    %483 = vst.msk [vmem:[#allocation13] sm:$0x3] %vm364, %v362
    // Predicated region
    $region54: #{tpu_custom_call.1} parent=1 // pred_check
      _
    $region55: #{tpu_custom_call.1} parent=1 // pred_check_branch
      %485 = sbr.rel (0) target = $region57
    $region56: #{tpu_custom_call.1} parent=1 // pred_region
      %s487 = ssub.s32 32, 32
      %488 = vsyncadd [#allocation4], %s487
      %s490 = sshll.u32 [#allocation10], 4
      %s491 = int_to_ptr.vmem [resolvable:$true] %s490
      %493 = dma.vmem_to_hbm [thread:$0]  %s491, 32, %s9, [#allocation4]
    $region57: #{tpu_custom_call.1} parent=1 // pred_fallthru
      _
    // Predicated region
    $region58: #{tpu_custom_call.1} parent=1 // pred_check
      _
    $region59: #{tpu_custom_call.1} parent=1 // pred_check_branch
      %495 = sbr.rel (0) target = $region61
    $region60: #{tpu_custom_call.1} parent=1 // pred_region
      %s497 = ssub.s32 32, 32
      %498 = vsyncadd [#allocation12], %s497
      %s500 = sshll.u32 [#allocation11], 4
      %s501 = int_to_ptr.vmem [resolvable:$true] %s500
      %503 = dma.vmem_to_hbm [thread:$0]  %s501, 32, %s10, [#allocation12]
    $region61: #{tpu_custom_call.1} parent=1 // pred_fallthru
      _
    // Predicated region
    $region62: #{tpu_custom_call.1} parent=1 // pred_check
      _
    $region63: #{tpu_custom_call.1} parent=1 // pred_check_branch
      %505 = sbr.rel (0) target = $region65
    $region64: #{tpu_custom_call.1} parent=1 // pred_region
      %s507 = ssub.s32 32, 32
      %508 = vsyncadd [#allocation12], %s507
      %s510 = sshll.u32 [#allocation13], 4
      %s511 = int_to_ptr.vmem [resolvable:$true] %s510
      %513 = dma.vmem_to_hbm [thread:$0]  %s511, 32, %s11, [#allocation12]
    $region65: #{tpu_custom_call.1} parent=1 // pred_fallthru
      _
    // Predicated region
    $region66: #{tpu_custom_call.1} parent=1 // pred_check
      _
    $region67: #{tpu_custom_call.1} parent=1 // pred_check_branch
      %515 = sbr.rel (0) target = $region69
    $region68: #{tpu_custom_call.1} parent=1 // pred_region
      %516 = dma.done [#allocation4], 32
    $region69: #{tpu_custom_call.1} parent=1 // pred_fallthru
      _
    // Predicated region
    $region70: #{tpu_custom_call.1} parent=1 // pred_check
      _
    $region71: #{tpu_custom_call.1} parent=1 // pred_check_branch
      %518 = sbr.rel (0) target = $region73
    $region72: #{tpu_custom_call.1} parent=1 // pred_region
      %519 = dma.done [#allocation12], 32
    $region73: #{tpu_custom_call.1} parent=1 // pred_fallthru
      _
    // Predicated region
    $region74: #{tpu_custom_call.1} parent=1 // pred_check
      _
    $region75: #{tpu_custom_call.1} parent=1 // pred_check_branch
      %521 = sbr.rel (0) target = $region77
    $region76: #{tpu_custom_call.1} parent=1 // pred_region
      %522 = dma.done [#allocation12], 32
    $region77: #{tpu_custom_call.1} parent=1 // pred_fallthru
      _
    %523 = vsyncpa [#allocation3], 1
    %524 = vsyncpa [#allocation6], 1
    %525 = vsyncpa [#allocation9], 1
    %526 = vsyncpa [#allocation4], 1
    %527 = vsyncpa [#allocation12], 1

</llo_original>
